<compile_context>
chip_gen: v6e
topology: v6e:2x2x1
jax: 0.10.0
libtpu: 0.0.40
codegen_flags: <defaults>
</compile_context>

<pallas_src>
import jax
import jax.numpy as jnp
from jax.experimental import pallas as pl
from jax.experimental.pallas import tpu as pltpu

_MIB = 1024 * 1024


def _round_up(x, m):
    return ((x + m - 1) // m) * m


def _vmem_capacity_bytes():
    try:
        return int(pltpu.get_tpu_info().vmem_capacity_bytes)
    except Exception:
        pass
    try:
        kind = jax.devices()[0].device_kind.lower()
    except Exception:
        kind = ""
    if "v7" in kind or "tpu7" in kind:
        return 64 * _MIB          # v7x: 64 MiB per TensorCore
    return 128 * _MIB             # v5e / v6e


def _pick_tile_n(H, w_item, vmem_cap):
    """Column-panel width of the pre-transposed weight (resident when it fits)."""
    resident_cap = (vmem_cap // 4) if vmem_cap >= 96 * _MIB else 16 * _MIB
    if H * H * w_item <= resident_cap:
        return H
    for cand in (2048, 1024, 512, 256, 128):
        if cand < H and H % cand == 0:
            return cand
    return H  # no lane-aligned divisor -> keep resident; budget loop shrinks tile_m


def _pooler_kernel(x_ref, wt_ref, b_ref, o_ref):
    # x_ref : (tile_m, H)       token tile in its HBM dtype
    # wt_ref: (H, tile_n)       pre-transposed weight panel (MXU dtype)
    # b_ref : (1, tile_n)       bias panel
    # o_ref : (tile_m, tile_n)
    x = x_ref[...].astype(wt_ref.dtype)                      # in-kernel cast (VPU)
    acc = jnp.dot(x, wt_ref[...], preferred_element_type=jnp.float32)
    acc = acc + b_ref[...].astype(jnp.float32)               # f32 epilogue
    o_ref[...] = jnp.tanh(acc).astype(o_ref.dtype)


def pooler_all(hidden_states, weight, bias, *, tile_m=None, matmul_dtype="auto",
               out_dtype=None):
    """tanh(hidden_states @ weight.T + bias) applied to every token.

    hidden_states: [B, S, H]; weight: [H, H] (PyTorch nn.Linear layout [out, in]);
    bias: [H].  matmul_dtype: "auto" (default, bf16 MXU operands for f32 inputs with
    f32 accumulation) or an explicit dtype (jnp.float32 for the exact path).
    out_dtype: output dtype (defaults to the input dtype).
    """
    B, S, H = hidden_states.shape
    in_dtype = jnp.dtype(hidden_states.dtype)
    out_dtype = jnp.dtype(in_dtype if out_dtype is None else out_dtype)

    if matmul_dtype is None or (isinstance(matmul_dtype, str) and matmul_dtype == "auto"):
        matmul_dtype = jnp.bfloat16 if in_dtype.itemsize >= 4 else in_dtype
    matmul_dtype = jnp.dtype(matmul_dtype)

    M = B * S
    x2d = hidden_states.reshape(M, H)          # free reshape, no HBM copy
    # One tiny H*H op: transpose to (in, out) and cast to the MXU dtype (fused by XLA),
    # so the kernel uses a plain (M,K)x(K,N) contraction -> no in-kernel weight transpose.
    wt = weight.T.astype(matmul_dtype)
    b2d = bias.reshape(1, H)

    x_item = in_dtype.itemsize                 # x stays in its HBM dtype (cast in kernel)
    w_item = matmul_dtype.itemsize
    o_item = out_dtype.itemsize
    b_item = jnp.dtype(b2d.dtype).itemsize

    vmem_cap = _vmem_capacity_bytes()
    sublane_m = 8

    # Token-axis alignment: pad only when B*S is not a multiple of 8 (<= 7 extra rows).
    M_al = _round_up(max(M, 1), sublane_m)
    padded = M_al != M
    if padded:
        x2d = jnp.pad(x2d, ((0, M_al - M), (0, 0)))

    # --- tile selection --------------------------------------------------------------
    if tile_m is None:
        if vmem_cap >= 96 * _MIB:              # v5e / v6e (128 MiB)
            tile_m = 2048 if x_item <= 2 else 1024
        else:                                  # v7x (64 MiB)
            tile_m = 1024 if x_item <= 2 else 512
    tile_m = _round_up(max(int(tile_m), sublane_m), sublane_m)
    tile_m = min(tile_m, M_al)

    tile_n = _pick_tile_n(H, w_item, vmem_cap)

    def _vmem_need(tm, tn):
        return (2 * H * tn * w_item            # weight panel (double-buffered)
                + 2 * tm * H * x_item          # x tile (double-buffered, HBM dtype)
                + 2 * tm * tn * o_item         # output tile (double-buffered)
                + 2 * tm * tn * 4              # f32 dot result + epilogue temporary
                + 2 * tn * b_item)             # bias panel

    budget = (vmem_cap * 7) // 10
    while _vmem_need(tile_m, tile_n) > budget:
        # Shrink the weight panel first (keeps weight HBM traffic and per-row MXU
        # efficiency); halve tile_m only as a last resort.
        if tile_n > 128 and (tile_n // 2) % 128 == 0:
            tile_n //= 2
        elif tile_m > sublane_m:
            tile_m = max(sublane_m, _round_up(tile_m // 2, sublane_m))
        else:
            break

    grid_m = pl.cdiv(M_al, tile_m)             # partial last block masked by Pallas
    grid_n = H // tile_n

    if grid_n == 1:
        # Resident weight: token-major grid; weight block index is constant so the
        # pipeline fetches it once.  Token axis parallel for megacore / 2-TC v7x.
        grid = (grid_m, 1)
        x_map = lambda i, j: (i, 0)
        w_map = lambda i, j: (0, 0)
        b_map = lambda i, j: (0, 0)
        o_map = lambda i, j: (i, 0)
        dims = ("parallel", "arbitrary")
    else:
        # Streamed weight: weight-panel-major grid so each (H, tile_n) panel is DMA'd
        # exactly once (x tiles re-stream once per panel, not the H*H weight per tile).
        grid = (grid_n, grid_m)
        x_map = lambda j, i: (i, 0)
        w_map = lambda j, i: (0, j)
        b_map = lambda j, i: (0, j)
        o_map = lambda j, i: (i, j)
        dims = ("arbitrary", "parallel")

    need = _vmem_need(tile_m, tile_n)
    vmem_limit = int(min((vmem_cap * 9) // 10, max(need + 8 * _MIB, 32 * _MIB)))

    x_passes = 1 if grid_n == 1 else grid_n
    cost = pl.CostEstimate(
        flops=2 * M_al * H * H,
        transcendentals=M_al * H,
        bytes_accessed=(x_passes * M_al * H * x_item + H * H * w_item
                        + H * b_item + M_al * H * o_item))

    out2d = pl.pallas_call(
        _pooler_kernel,
        out_shape=jax.ShapeDtypeStruct((M_al, H), out_dtype),
        grid_spec=pltpu.PrefetchScalarGridSpec(
            num_scalar_prefetch=0,
            grid=grid,
            in_specs=[
                pl.BlockSpec((tile_m, H), x_map),      # token tile
                pl.BlockSpec((H, tile_n), w_map),      # weight panel (pre-transposed)
                pl.BlockSpec((1, tile_n), b_map),      # bias panel
            ],
            out_specs=pl.BlockSpec((tile_m, tile_n), o_map),
        ),
        compiler_params=pltpu.CompilerParams(
            dimension_semantics=dims,
            vmem_limit_bytes=vmem_limit),
        cost_estimate=cost,
    )(x2d, wt, b2d)

    if padded:
        out2d = out2d[:M]
    return out2d.reshape(B, S, H)


if __name__ == "__main__":
    B, S, H = 2, 8, 32  # batch, seq, hidden_size

    key = jax.random.PRNGKey(0)
    k_x, k_w, k_b = jax.random.split(key, 3)

    hidden_states = jax.random.normal(k_x, (B, S, H), dtype=jnp.float32)
    # Shapes match nn.Linear(H, H): weight [out, in], bias [out]
    weight = jax.random.normal(k_w, (H, H), dtype=jnp.float32) * 0.02
    bias = jax.random.normal(k_b, (H,), dtype=jnp.float32) * 0.02

    ref = jnp.tanh(hidden_states @ weight.T + bias)

    # Exact (f32 MXU operand) path.
    out_f32 = jax.block_until_ready(
        pooler_all(hidden_states, weight, bias, matmul_dtype=jnp.float32))
    assert out_f32.shape == (B, S, H)
    assert jnp.allclose(out_f32, ref, atol=5e-5, rtol=5e-5)

    # Default path: bf16 MXU operands, f32 accumulate + f32 bias/tanh epilogue.
    out_def = jax.block_until_ready(pooler_all(hidden_states, weight, bias))
    assert out_def.shape == (B, S, H)
    assert jnp.allclose(out_def, ref, atol=2e-2, rtol=2e-2)

    # Multi-step token grid (exercises pipelined x tiles).
    out_tiled = jax.block_until_ready(
        pooler_all(hidden_states, weight, bias, tile_m=8, matmul_dtype=jnp.float32))
    assert jnp.allclose(out_tiled, ref, atol=5e-5, rtol=5e-5)

    # Ragged B*S not sublane-aligned (tiny pad + slice-back path).
    B2, S2 = 3, 5
    hs2 = jax.random.normal(jax.random.PRNGKey(1), (B2, S2, H), dtype=jnp.float32)
    ref2 = jnp.tanh(hs2 @ weight.T + bias)
    out2 = jax.block_until_ready(pooler_all(hs2, weight, bias, matmul_dtype=jnp.float32))
    assert out2.shape == (B2, S2, H)
    assert jnp.allclose(out2, ref2, atol=5e-5, rtol=5e-5)

    # Token count multiple of 8 but not of tile_m: masked partial last block, no pad.
    B3, S3 = 2, 12
    hs3 = jax.random.normal(jax.random.PRNGKey(2), (B3, S3, H), dtype=jnp.float32)
    ref3 = jnp.tanh(hs3 @ weight.T + bias)
    out3 = jax.block_until_ready(
        pooler_all(hs3, weight, bias, tile_m=16, matmul_dtype=jnp.float32))
    assert out3.shape == (B3, S3, H)
    assert jnp.allclose(out3, ref3, atol=5e-5, rtol=5e-5)

    # bf16 output writeback (halves M*H output HBM traffic when downstream tolerates it).
    out_bf16o = jax.block_until_ready(
        pooler_all(hidden_states, weight, bias, out_dtype=jnp.bfloat16))
    assert out_bf16o.dtype == jnp.bfloat16
    assert jnp.allclose(out_bf16o.astype(jnp.float32), ref, atol=3e-2, rtol=3e-2)

    print("KERNEL_OK")
</pallas_src>

<mosaic_0001>
module attributes {stable_mosaic.version = 11 : i64} {
  func.func @_pooler_kernel(%arg0: i32, %arg1: i32, %arg2: memref<16x32xf32, #tpu.memory_space<vmem>>, %arg3: memref<32x32xf32, #tpu.memory_space<vmem>>, %arg4: memref<1x32xf32, #tpu.memory_space<vmem>>, %arg5: memref<16x32xf32, #tpu.memory_space<vmem>>) attributes {dimension_semantics = [#tpu.dimension_semantics<parallel>, #tpu.dimension_semantics<arbitrary>], iteration_bounds = array<i64: 1, 1>, scalar_prefetch = 0 : i64, scratch_operands = 0 : i64, tpu.core_type = #tpu.core_type<tc>, window_params = [{transform_indices = @transform_0, window_bounds = array<i64: 16, 32>}, {pipeline_mode = #tpu.pipeline_mode<synchronous>, transform_indices = @transform_1, window_bounds = array<i64: 32, 32>}, {pipeline_mode = #tpu.pipeline_mode<synchronous>, transform_indices = @transform_2, window_bounds = array<i64: 1, 32>}, {transform_indices = @transform_3, window_bounds = array<i64: 16, 32>}]} {
    %c0 = arith.constant 0 : index
    %c0_0 = arith.constant 0 : index
    %0 = vector.load %arg2[%c0, %c0_0] : memref<16x32xf32, #tpu.memory_space<vmem>>, vector<16x32xf32>
    %c0_1 = arith.constant 0 : index
    %c0_2 = arith.constant 0 : index
    %1 = vector.load %arg3[%c0_1, %c0_2] : memref<32x32xf32, #tpu.memory_space<vmem>>, vector<32x32xf32>
    %cst = arith.constant dense<0.000000e+00> : vector<16x32xf32>
    %2 = tpu.matmul %0, %1, %cst {dimension_numbers = #tpu.dot_dimension_numbers<[1], [0], [0], [1], [0, 0, 1, 1], [], []>} : vector<16x32xf32>, vector<32x32xf32>, vector<16x32xf32> -> vector<16x32xf32>
    %c0_3 = arith.constant 0 : index
    %c0_4 = arith.constant 0 : index
    %3 = vector.load %arg4[%c0_3, %c0_4] : memref<1x32xf32, #tpu.memory_space<vmem>>, vector<1x32xf32>
    %4 = vector.broadcast %3 : vector<1x32xf32> to vector<16x32xf32>
    %5 = arith.addf %2, %4 : vector<16x32xf32>
    %6 = math.tanh %5 : vector<16x32xf32>
    %c0_5 = arith.constant 0 : index
    %c0_6 = arith.constant 0 : index
    %7 = vector.load %arg5[%c0_5, %c0_6] : memref<16x32xf32, #tpu.memory_space<vmem>>, vector<16x32xf32>
    tpu.vector_store %arg5[%c0_5, %c0_6], %6 {strides = array<i32>} : memref<16x32xf32, #tpu.memory_space<vmem>>, vector<16x32xf32>,
    return
  }
  func.func @transform_0(%arg0: i32, %arg1: i32) -> (i32, i32) {
    %c0_i32 = arith.constant 0 : i32
    %c0_i32_0 = arith.constant 0 : i32
    return %arg0, %c0_i32 : i32, i32
  }
  func.func @transform_1(%arg0: i32, %arg1: i32) -> (i32, i32) {
    %c0_i32 = arith.constant 0 : i32
    %c0_i32_0 = arith.constant 0 : i32
    %c0_i32_1 = arith.constant 0 : i32
    return %c0_i32, %c0_i32_0 : i32, i32
  }
  func.func @transform_2(%arg0: i32, %arg1: i32) -> (i32, i32) {
    %c0_i32 = arith.constant 0 : i32
    %c0_i32_0 = arith.constant 0 : i32
    %c0_i32_1 = arith.constant 0 : i32
    return %c0_i32, %c0_i32_0 : i32, i32
  }
  func.func @transform_3(%arg0: i32, %arg1: i32) -> (i32, i32) {
    %c0_i32 = arith.constant 0 : i32
    %c0_i32_0 = arith.constant 0 : i32
    return %arg0, %c0_i32 : i32, i32
  }
}

</mosaic_0001>

<llo_original>
// kernel: tpu_custom_call.1
$region0: #{tpu_custom_call.1}
  #allocation0 [shape = 'u32[]', space=smem, size = 0x4, offset = 0x4, fixed_abs, tag = 'smem constant byte address 0x4 - core index']
  #allocation1 [shape = 'u32[144,128]{1,0:T(1,128)}', space=vmem, size = 0x12000, scoped, tag = 'internal scratch']
  %s0 = inlined_call_operand.hbm [shape: f32[16,32], index: 0, kind: input, shape index: {}]
  %s1 = inlined_call_operand.hbm [shape: f32[32,32], index: 1, kind: input, shape index: {}]
  %s2 = inlined_call_operand.vmem [shape: f32[1,32], index: 2, kind: input, shape index: {}]
  %s3 = inlined_call_operand.hbm [shape: f32[16,32], index: 3, kind: output, shape index: {}]
  %s4 = sld [smem:[#allocation0]]
  $region30: #{tpu_custom_call.1} parent=0
    _
  %s6 = ssub.s32 1, %s4
  %s7 = scalar_select 0, %s6, %s4
  $region1: #{tpu_custom_call.1} parent=0
    #allocation2 [shape = 'u8[8192]{0}', space=vmem, size = 0x2000, scoped, tag = 'input window, operand 0, single buffered']
    #allocation3 [shape = 's32[1]{0}', space=sflag, size = 0x4, scoped, tag = 'scoped memory for tpu_custom_call.1']
    #allocation4 [shape = 's32[1]{0}', space=sflag, size = 0x4, scoped, tag = 'scoped memory for tpu_custom_call.1']
    #allocation5 [shape = 'u8[16384]{0}', space=vmem, size = 0x4000, scoped, tag = 'input window, operand 1, single buffered']
    #allocation6 [shape = 's32[1]{0}', space=sflag, size = 0x4, scoped, tag = 'scoped memory for tpu_custom_call.1']
    #allocation7 [shape = 'u8[8192]{0}', space=vmem, size = 0x2000, scoped, tag = 'output window, operand 0, single buffered']
    %8 = vsyncpa [#allocation3], 0
    %9 = vsyncpa [#allocation6], 0
    %10 = vsyncpa [#allocation4], 0
    // Predicated region
    $region2: #{tpu_custom_call.1} parent=1 // pred_check
      _
    $region3: #{tpu_custom_call.1} parent=1 // pred_check_branch
      %12 = sbr.rel (0) target = $region5
    $region4: #{tpu_custom_call.1} parent=1 // pred_region
      %s14 = ssub.s32 256, 256
      %15 = vsyncadd [#allocation3], %s14
      %s16 = sshll.u32 [#allocation2], 4
      %s17 = int_to_ptr.vmem [resolvable:$true] %s16
      %22 = dma.hbm_to_vmem [thread:$0]  %s0, 256, %s17, [#allocation3], 128, 128, 8
    $region5: #{tpu_custom_call.1} parent=1 // pred_fallthru
      _
    // Predicated region
    $region6: #{tpu_custom_call.1} parent=1 // pred_check
      _
    $region7: #{tpu_custom_call.1} parent=1 // pred_check_branch
      %24 = sbr.rel (0) target = $region9
    $region8: #{tpu_custom_call.1} parent=1 // pred_region
      %s26 = ssub.s32 512, 512
      %27 = vsyncadd [#allocation6], %s26
      %s28 = sshll.u32 [#allocation5], 4
      %s29 = int_to_ptr.vmem [resolvable:$true] %s28
      %34 = dma.hbm_to_vmem [thread:$0]  %s1, 512, %s29, [#allocation6], 128, 128, 8
    $region9: #{tpu_custom_call.1} parent=1 // pred_fallthru
      _
    // Predicated region
    $region10: #{tpu_custom_call.1} parent=1 // pred_check
      _
    $region11: #{tpu_custom_call.1} parent=1 // pred_check_branch
      %36 = sbr.rel (0) target = $region13
    $region12: #{tpu_custom_call.1} parent=1 // pred_region
      _
    $region13: #{tpu_custom_call.1} parent=1 // pred_fallthru
      _
    // Predicated region
    $region14: #{tpu_custom_call.1} parent=1 // pred_check
      _
    $region15: #{tpu_custom_call.1} parent=1 // pred_check_branch
      %38 = sbr.rel (0) target = $region17
    $region16: #{tpu_custom_call.1} parent=1 // pred_region
      %39 = dma.done [#allocation3], 256
    $region17: #{tpu_custom_call.1} parent=1 // pred_fallthru
      _
    // Predicated region
    $region18: #{tpu_custom_call.1} parent=1 // pred_check
      _
    $region19: #{tpu_custom_call.1} parent=1 // pred_check_branch
      %41 = sbr.rel (0) target = $region21
    $region20: #{tpu_custom_call.1} parent=1 // pred_region
      %42 = dma.done [#allocation6], 512
    $region21: #{tpu_custom_call.1} parent=1 // pred_fallthru
      _
    %v43 = vld [vmem:[#allocation2] sm:$0xff]
    %v44 = vld [vmem:[#allocation2 + $0x8] sm:$0xff]
    %v45 = vld [vmem:[#allocation5] sm:$0xff]
    %v46 = vld [vmem:[#allocation5 + $0x8] sm:$0xff]
    %v47 = vld [vmem:[#allocation5 + $0x10] sm:$0xff]
    %v48 = vld [vmem:[#allocation5 + $0x18] sm:$0xff]
    %v49 = vld [vmem:[%s2] sm:$0x1]
    %v51 = vlaneseq
    %v52 = vshrl.u32 %v51, 7
    %v53 = vsub.s32 0, %v52
    %v54 = vrot.slane %v49, %v53
    %vm56 = vcmask 261120
    %v58 = vsel %vm56, %v43, 0
    %v61 = vsel %vm56, %v44, 0
    %63 = vmatprep.subr.mxu0 0.0
    %64 = vmatpush1.msra.mxu0 0.0
    %65 = vmatprep.subr.mxu0 0.0
    %66 = vmatpush1.msra.mxu0 0.0
    %67 = vmatprep.subr.mxu0 0.0
    %68 = vmatpush1.msra.mxu0 0.0
    %69 = vmatprep.subr.mxu0 0.0
    %70 = vmatpush1.msra.mxu0 0.0
    %71 = vmatprep.subr.mxu0 0.0
    %72 = vmatpush1.msra.mxu0 0.0
    %73 = vmatprep.subr.mxu0 0.0
    %74 = vmatpush1.msra.mxu0 0.0
    %75 = vmatprep.subr.mxu0 0.0
    %76 = vmatpush1.msra.mxu0 0.0
    %77 = vmatprep.subr.mxu0 0.0
    %78 = vmatpush1.msra.mxu0 0.0
    %79 = vmatprep.subr.mxu0 0.0
    %80 = vmatpush1.msra.mxu0 0.0
    %81 = vmatprep.subr.mxu0 0.0
    %82 = vmatpush1.msra.mxu0 0.0
    %83 = vmatprep.subr.mxu0 0.0
    %84 = vmatpush1.msra.mxu0 0.0
    %85 = vmatprep.subr.mxu0 0.0
    %86 = vmatpush1.msra.mxu0 0.0
    %87 = vmatprep.subr.mxu0 0.0
    %88 = vmatpush1.msra.mxu0 %v48
    %89 = vmatprep.subr.mxu0 0.0
    %90 = vmatpush1.msra.mxu0 %v47
    %91 = vmatprep.subr.mxu0 0.0
    %92 = vmatpush1.msra.mxu0 %v46
    %93 = vmatprep.subr.mxu0 0.0
    %94 = vmatpush1.msra.mxu0 %v45
    %95 = vmatprep.subr.mxu0 0.0
    %96 = vmatpush2.msra.mxu0 0.0
    %97 = vmatprep.subr.mxu0 0.0
    %98 = vmatpush2.msra.mxu0 0.0
    %99 = vmatprep.subr.mxu0 0.0
    %100 = vmatpush2.msra.mxu0 0.0
    %101 = vmatprep.subr.mxu0 0.0
    %102 = vmatpush2.msra.mxu0 0.0
    %103 = vmatprep.subr.mxu0 0.0
    %104 = vmatpush2.msra.mxu0 0.0
    %105 = vmatprep.subr.mxu0 0.0
    %106 = vmatpush2.msra.mxu0 0.0
    %107 = vmatprep.subr.mxu0 0.0
    %108 = vmatpush2.msra.mxu0 0.0
    %109 = vmatprep.subr.mxu0 0.0
    %110 = vmatpush2.msra.mxu0 0.0
    %111 = vmatprep.subr.mxu0 0.0
    %112 = vmatpush2.msra.mxu0 0.0
    %113 = vmatprep.subr.mxu0 0.0
    %114 = vmatpush2.msra.mxu0 0.0
    %115 = vmatprep.subr.mxu0 0.0
    %116 = vmatpush2.msra.mxu0 0.0
    %117 = vmatprep.subr.mxu0 0.0
    %118 = vmatpush2.msra.mxu0 0.0
    %119 = vmatprep.subr.mxu0 0.0
    %120 = vmatpush2.msra.mxu0 0.0
    %121 = vmatprep.subr.mxu0 0.0
    %122 = vmatpush2.msra.mxu0 0.0
    %123 = vmatprep.subr.mxu0 0.0
    %124 = vmatpush2.msra.mxu0 0.0
    %125 = vmatprep.subr.mxu0 0.0
    %126 = vmatpush2.msra.mxu0 0.0
    %127 = vmatprep.mubr.f32.mxu0 0.0
    %128 = vmatmul.mubr.f32.gmra.mxu0 %v58
    %v129 = vpop.f32.mrf.mxu0
    %v130 = vadd.f32 %v54, %v129
    %v131 = vpop.f32.mrf.mxu0
    %132 = vmatprep.mubr.f32.mxu0 0.0
    %133 = vmatmul.mubr.f32.gmra.mxu0 %v61
    %v134 = vpop.f32.mrf.mxu0
    %v135 = vadd.f32 %v54, %v134
    %v136 = vpop.f32.mrf.mxu0
    %137 = vdwg.mxu0
    %v138 = vtanh.pop %v130
    %v139 = vtanh.pop %v135
    %140 = vst.msk [vmem:[#allocation7] sm:$0xff] %vm56, %v138
    %141 = vst.msk [vmem:[#allocation7 + $0x8] sm:$0xff] %vm56, %v139
    // Predicated region
    $region22: #{tpu_custom_call.1} parent=1 // pred_check
      _
    $region23: #{tpu_custom_call.1} parent=1 // pred_check_branch
      %143 = sbr.rel (0) target = $region25
    $region24: #{tpu_custom_call.1} parent=1 // pred_region
      %s145 = ssub.s32 256, 256
      %146 = vsyncadd [#allocation4], %s145
      %s147 = sshll.u32 [#allocation7], 4
      %s148 = int_to_ptr.vmem [resolvable:$true] %s147
      %153 = dma.vmem_to_hbm [thread:$0]  %s148, 256, %s3, [#allocation4], 128, 128, 8
    $region25: #{tpu_custom_call.1} parent=1 // pred_fallthru
      _
    // Predicated region
    $region26: #{tpu_custom_call.1} parent=1 // pred_check
      _
    $region27: #{tpu_custom_call.1} parent=1 // pred_check_branch
      %155 = sbr.rel (0) target = $region29
    $region28: #{tpu_custom_call.1} parent=1 // pred_region
      %156 = dma.done [#allocation4], 256
    $region29: #{tpu_custom_call.1} parent=1 // pred_fallthru
      _
    %157 = vsyncpa [#allocation3], 1
    %158 = vsyncpa [#allocation6], 1
    %159 = vsyncpa [#allocation4], 1

</llo_original>
